<compile_context>
chip_gen: v6e
topology: v6e:2x2x1
jax: 0.10.0
libtpu: 0.0.40
codegen_flags: <defaults>
</compile_context>

<pallas_src>
import functools

import numpy as np
import jax
import jax.numpy as jnp
from jax.experimental import pallas as pl
from jax.experimental.pallas import tpu as pltpu


def _make_kernel_np(sigma):
    """Mirror of DoGLayer2._make_kernel -> (radius, g1d) in float32."""
    radius = max(int(3 * sigma), 1)
    size = 2 * radius + 1
    coords = np.arange(size, dtype=np.float32) - np.float32(radius)
    g = np.exp(-(coords ** 2) / np.float32(2.0 * sigma * sigma)).astype(np.float32)
    g = (g / g.sum(dtype=np.float32)).astype(np.float32)
    return radius, g


def _dog_kernel(gpad_ref, out_ref, acc0_ref, acc1_ref, *,
                H, accW, Rmax, r0, g0, r1, g1):
    # gpad_ref : (Hp, B*Wp)  zero-padded, batch-lane-packed grayscale slab.
    # out_ref  : (H, accW)   DoG slab; image b's valid columns are [b*Wp, b*Wp+W).
    # acc*_ref : (Hp, accW)  VMEM scratch for the horizontally blurred slabs.

    # ---- Horizontal pass: fused over both sigmas, symmetric taps folded ----
    acc0 = None  # blur with sigmas[0]
    acc1 = None  # blur with sigmas[-1]
    for d in range(Rmax + 1):
        if d == 0:
            s = gpad_ref[:, Rmax:Rmax + accW]
        else:
            # One shifted-pair load per |d|, shared by both sigmas.
            s = (gpad_ref[:, Rmax + d:Rmax + d + accW]
                 + gpad_ref[:, Rmax - d:Rmax - d + accW])
        if d <= r0:
            w0 = jnp.float32(float(g0[r0 + d]))
            acc0 = w0 * s if acc0 is None else acc0 + w0 * s
        if d <= r1:
            w1 = jnp.float32(float(g1[r1 + d]))
            acc1 = w1 * s if acc1 is None else acc1 + w1 * s
    acc0_ref[...] = acc0
    acc1_ref[...] = acc1

    # ---- Vertical pass: static sublane-offset ref loads, signed DoG accum ----
    dog = None
    for d in range(Rmax + 1):
        if d <= r1:  # + blur(sigma_last)
            rows = (acc1_ref[Rmax:Rmax + H, :] if d == 0 else
                    acc1_ref[Rmax + d:Rmax + d + H, :]
                    + acc1_ref[Rmax - d:Rmax - d + H, :])
            w1 = jnp.float32(float(g1[r1 + d]))
            dog = w1 * rows if dog is None else dog + w1 * rows
        if d <= r0:  # - blur(sigma_first)
            rows = (acc0_ref[Rmax:Rmax + H, :] if d == 0 else
                    acc0_ref[Rmax + d:Rmax + d + H, :]
                    + acc0_ref[Rmax - d:Rmax - d + H, :])
            w0 = jnp.float32(float(g0[r0 + d]))
            dog = dog - w0 * rows
    out_ref[...] = dog.astype(out_ref.dtype)


def dog_layer2(x, sigmas):
    """x: (B, C, H, W). Returns (B, 1, H, W) float32 DoG response."""
    assert isinstance(sigmas, (list, tuple)) and len(sigmas) >= 2
    B, C, H, W = x.shape
    x = x.astype(jnp.float32)

    # Telescoping DoG: only the first and last sigma contribute.
    r0, g0 = _make_kernel_np(sigmas[0])
    r1, g1 = _make_kernel_np(sigmas[-1])
    Rmax = max(r0, r1)
    Hp, Wp = H + 2 * Rmax, W + 2 * Rmax
    # Interior lane span covering every image's valid output columns.
    accW = B * Wp - 2 * Rmax

    # Grayscale first (1 channel instead of C gets padded / DMA'd).
    if C == 3:
        gray = (jnp.float32(0.2989) * x[:, 0]
                + jnp.float32(0.587) * x[:, 1]
                + jnp.float32(0.114) * x[:, 2])
    else:
        gray = x[:, 0]

    # Zero-pad each image by Rmax (== each conv's padding=radius with zeros),
    # then pack the batch along the lane axis: (Hp, B*Wp).  The per-image zero
    # halo guarantees horizontal taps never cross image boundaries.
    gpad = jnp.pad(gray, ((0, 0), (Rmax, Rmax), (Rmax, Rmax)))   # (B, Hp, Wp)
    gpacked = jnp.transpose(gpad, (1, 0, 2)).reshape(Hp, B * Wp)  # (Hp, B*Wp)

    kernel = functools.partial(_dog_kernel, H=H, accW=accW, Rmax=Rmax,
                               r0=r0, g0=g0, r1=r1, g1=g1)

    out2d = pl.pallas_call(
        kernel,
        out_shape=jax.ShapeDtypeStruct((H, accW), jnp.float32),
        grid_spec=pltpu.PrefetchScalarGridSpec(
            num_scalar_prefetch=0,
            grid=(1,),
            in_specs=[pl.BlockSpec((Hp, B * Wp), lambda i: (0, 0))],
            out_specs=pl.BlockSpec((H, accW), lambda i: (0, 0)),
            scratch_shapes=[pltpu.VMEM((Hp, accW), jnp.float32),
                            pltpu.VMEM((Hp, accW), jnp.float32)],
        ),
        compiler_params=pltpu.CompilerParams(
            dimension_semantics=("arbitrary",)),
    )(gpacked)

    # Unpack: image b occupies out2d columns [b*Wp, b*Wp + W).
    out_full = jnp.pad(out2d, ((0, 0), (0, 2 * Rmax)))   # (H, B*Wp)
    out = out_full.reshape(H, B, Wp)[:, :, :W]            # (H, B, W)
    return jnp.transpose(out, (1, 0, 2))[:, None]          # (B, 1, H, W)


def _dog_layer2_ref_np(x, sigmas):
    """Exact float64 NumPy reference mirroring the PyTorch forward (all sigmas).

    NumPy (not lax.conv) so the check is against exact math and is immune to
    TPU matmul/conv precision defaults.
    """
    x = np.asarray(x, dtype=np.float64)
    B, C, H, W = x.shape
    if C == 3:
        gray = 0.2989 * x[:, 0] + 0.587 * x[:, 1] + 0.114 * x[:, 2]
    else:
        gray = x[:, 0]
    blurred = []
    for s in sigmas:
        radius, g1d = _make_kernel_np(s)
        g = g1d.astype(np.float64)
        gp = np.pad(gray, ((0, 0), (radius, radius), (radius, radius)))
        acc_h = np.zeros((B, H + 2 * radius, W), dtype=np.float64)
        for k in range(2 * radius + 1):
            acc_h += g[k] * gp[:, :, k:k + W]
        acc_v = np.zeros((B, H, W), dtype=np.float64)
        for k in range(2 * radius + 1):
            acc_v += g[k] * acc_h[:, k:k + H, :]
        blurred.append(acc_v)
    dog = np.zeros_like(blurred[0])
    for prev, curr in zip(blurred, blurred[1:]):
        dog = dog + (curr - prev)
    return dog[:, None]  # (B, 1, H, W)


if __name__ == "__main__":
    sigmas = [1.0, 1.6, 2.2]
    dog_fn = jax.jit(lambda inp: dog_layer2(inp, sigmas))

    # RGB path (3 channels -> weighted grayscale).
    x = jax.random.normal(jax.random.PRNGKey(0), (2, 3, 16, 16), jnp.float32)
    out = jax.block_until_ready(dog_fn(x))
    assert out.shape == (2, 1, 16, 16) and out.dtype == jnp.float32
    ref = _dog_layer2_ref_np(np.asarray(x), sigmas)
    np.testing.assert_allclose(np.asarray(out), ref, rtol=1e-4, atol=1e-4)

    # Non-RGB path (C != 3 uses channel 0, matching the module).
    x1 = jax.random.normal(jax.random.PRNGKey(1), (2, 4, 16, 16), jnp.float32)
    out1 = jax.block_until_ready(dog_fn(x1))
    ref1 = _dog_layer2_ref_np(np.asarray(x1), sigmas)
    np.testing.assert_allclose(np.asarray(out1), ref1, rtol=1e-4, atol=1e-4)

    print("KERNEL_OK")
</pallas_src>

<mosaic_0001>
module attributes {stable_mosaic.version = 11 : i64} {
  func.func @_dog_kernel(%arg0: i32, %arg1: memref<28x56xf32, #tpu.memory_space<vmem>>, %arg2: memref<16x44xf32, #tpu.memory_space<vmem>>, %arg3: memref<28x44xf32, #tpu.memory_space<vmem>>, %arg4: memref<28x44xf32, #tpu.memory_space<vmem>>) attributes {dimension_semantics = [#tpu.dimension_semantics<arbitrary>], iteration_bounds = array<i64: 1>, scalar_prefetch = 0 : i64, scratch_operands = 2 : i64, tpu.core_type = #tpu.core_type<tc>, window_params = [{pipeline_mode = #tpu.pipeline_mode<synchronous>, transform_indices = @transform_0, window_bounds = array<i64: 28, 56>}, {pipeline_mode = #tpu.pipeline_mode<synchronous>, transform_indices = @transform_1, window_bounds = array<i64: 16, 44>}]} {
    %c0 = arith.constant 0 : index
    %c6 = arith.constant 6 : index
    %0 = vector.load %arg1[%c0, %c6] : memref<28x56xf32, #tpu.memory_space<vmem>>, vector<28x44xf32>
    %cst = arith.constant 0.399050266 : f32
    %1 = vector.broadcast %cst : f32 to vector<28x44xf32>
    %2 = arith.mulf %1, %0 : vector<28x44xf32>
    %cst_0 = arith.constant 0.18186152 : f32
    %3 = vector.broadcast %cst_0 : f32 to vector<28x44xf32>
    %4 = arith.mulf %3, %0 : vector<28x44xf32>
    %c0_1 = arith.constant 0 : index
    %c7 = arith.constant 7 : index
    %5 = vector.load %arg1[%c0_1, %c7] : memref<28x56xf32, #tpu.memory_space<vmem>>, vector<28x44xf32>
    %c0_2 = arith.constant 0 : index
    %c5 = arith.constant 5 : index
    %6 = vector.load %arg1[%c0_2, %c5] : memref<28x56xf32, #tpu.memory_space<vmem>>, vector<28x44xf32>
    %7 = arith.addf %5, %6 : vector<28x44xf32>
    %cst_3 = arith.constant 0.242036223 : f32
    %8 = vector.broadcast %cst_3 : f32 to vector<28x44xf32>
    %9 = arith.mulf %8, %7 : vector<28x44xf32>
    %10 = arith.addf %2, %9 : vector<28x44xf32>
    %cst_4 = arith.constant 0.164012015 : f32
    %11 = vector.broadcast %cst_4 : f32 to vector<28x44xf32>
    %12 = arith.mulf %11, %7 : vector<28x44xf32>
    %13 = arith.addf %4, %12 : vector<28x44xf32>
    %c0_5 = arith.constant 0 : index
    %c8 = arith.constant 8 : index
    %14 = vector.load %arg1[%c0_5, %c8] : memref<28x56xf32, #tpu.memory_space<vmem>>, vector<28x44xf32>
    %c0_6 = arith.constant 0 : index
    %c4 = arith.constant 4 : index
    %15 = vector.load %arg1[%c0_6, %c4] : memref<28x56xf32, #tpu.memory_space<vmem>>, vector<28x44xf32>
    %16 = arith.addf %14, %15 : vector<28x44xf32>
    %cst_7 = arith.constant 0.0540055782 : f32
    %17 = vector.broadcast %cst_7 : f32 to vector<28x44xf32>
    %18 = arith.mulf %17, %16 : vector<28x44xf32>
    %19 = arith.addf %10, %18 : vector<28x44xf32>
    %cst_8 = arith.constant 0.12030407 : f32
    %20 = vector.broadcast %cst_8 : f32 to vector<28x44xf32>
    %21 = arith.mulf %20, %16 : vector<28x44xf32>
    %22 = arith.addf %13, %21 : vector<28x44xf32>
    %c0_9 = arith.constant 0 : index
    %c9 = arith.constant 9 : index
    %23 = vector.load %arg1[%c0_9, %c9] : memref<28x56xf32, #tpu.memory_space<vmem>>, vector<28x44xf32>
    %c0_10 = arith.constant 0 : index
    %c3 = arith.constant 3 : index
    %24 = vector.load %arg1[%c0_10, %c3] : memref<28x56xf32, #tpu.memory_space<vmem>>, vector<28x44xf32>
    %25 = arith.addf %23, %24 : vector<28x44xf32>
    %cst_11 = arith.constant 0.00443304796 : f32
    %26 = vector.broadcast %cst_11 : f32 to vector<28x44xf32>
    %27 = arith.mulf %26, %25 : vector<28x44xf32>
    %28 = arith.addf %19, %27 : vector<28x44xf32>
    %cst_12 = arith.constant 0.0717719346 : f32
    %29 = vector.broadcast %cst_12 : f32 to vector<28x44xf32>
    %30 = arith.mulf %29, %25 : vector<28x44xf32>
    %31 = arith.addf %22, %30 : vector<28x44xf32>
    %c0_13 = arith.constant 0 : index
    %c10 = arith.constant 10 : index
    %32 = vector.load %arg1[%c0_13, %c10] : memref<28x56xf32, #tpu.memory_space<vmem>>, vector<28x44xf32>
    %c0_14 = arith.constant 0 : index
    %c2 = arith.constant 2 : index
    %33 = vector.load %arg1[%c0_14, %c2] : memref<28x56xf32, #tpu.memory_space<vmem>>, vector<28x44xf32>
    %34 = arith.addf %32, %33 : vector<28x44xf32>
    %cst_15 = arith.constant 0.0348256119 : f32
    %35 = vector.broadcast %cst_15 : f32 to vector<28x44xf32>
    %36 = arith.mulf %35, %34 : vector<28x44xf32>
    %37 = arith.addf %31, %36 : vector<28x44xf32>
    %c0_16 = arith.constant 0 : index
    %c11 = arith.constant 11 : index
    %38 = vector.load %arg1[%c0_16, %c11] : memref<28x56xf32, #tpu.memory_space<vmem>>, vector<28x44xf32>
    %c0_17 = arith.constant 0 : index
    %c1 = arith.constant 1 : index
    %39 = vector.load %arg1[%c0_17, %c1] : memref<28x56xf32, #tpu.memory_space<vmem>>, vector<28x44xf32>
    %40 = arith.addf %38, %39 : vector<28x44xf32>
    %cst_18 = arith.constant 0.0137439817 : f32
    %41 = vector.broadcast %cst_18 : f32 to vector<28x44xf32>
    %42 = arith.mulf %41, %40 : vector<28x44xf32>
    %43 = arith.addf %37, %42 : vector<28x44xf32>
    %c0_19 = arith.constant 0 : index
    %c12 = arith.constant 12 : index
    %44 = vector.load %arg1[%c0_19, %c12] : memref<28x56xf32, #tpu.memory_space<vmem>>, vector<28x44xf32>
    %c0_20 = arith.constant 0 : index
    %c0_21 = arith.constant 0 : index
    %45 = vector.load %arg1[%c0_20, %c0_21] : memref<28x56xf32, #tpu.memory_space<vmem>>, vector<28x44xf32>
    %46 = arith.addf %44, %45 : vector<28x44xf32>
    %cst_22 = arith.constant 0.0044115996 : f32
    %47 = vector.broadcast %cst_22 : f32 to vector<28x44xf32>
    %48 = arith.mulf %47, %46 : vector<28x44xf32>
    %49 = arith.addf %43, %48 : vector<28x44xf32>
    %c0_23 = arith.constant 0 : index
    %c0_24 = arith.constant 0 : index
    %50 = vector.load %arg3[%c0_23, %c0_24] : memref<28x44xf32, #tpu.memory_space<vmem>>, vector<28x44xf32>
    tpu.vector_store %arg3[%c0_23, %c0_24], %28 {strides = array<i32>} : memref<28x44xf32, #tpu.memory_space<vmem>>, vector<28x44xf32>,
    %c0_25 = arith.constant 0 : index
    %c0_26 = arith.constant 0 : index
    %51 = vector.load %arg4[%c0_25, %c0_26] : memref<28x44xf32, #tpu.memory_space<vmem>>, vector<28x44xf32>
    tpu.vector_store %arg4[%c0_25, %c0_26], %49 {strides = array<i32>} : memref<28x44xf32, #tpu.memory_space<vmem>>, vector<28x44xf32>,
    %c6_27 = arith.constant 6 : index
    %c0_28 = arith.constant 0 : index
    %52 = vector.load %arg4[%c6_27, %c0_28] : memref<28x44xf32, #tpu.memory_space<vmem>>, vector<16x44xf32>
    %cst_29 = arith.constant 0.18186152 : f32
    %53 = vector.broadcast %cst_29 : f32 to vector<16x44xf32>
    %54 = arith.mulf %53, %52 : vector<16x44xf32>
    %c6_30 = arith.constant 6 : index
    %c0_31 = arith.constant 0 : index
    %55 = vector.load %arg3[%c6_30, %c0_31] : memref<28x44xf32, #tpu.memory_space<vmem>>, vector<16x44xf32>
    %cst_32 = arith.constant 0.399050266 : f32
    %56 = vector.broadcast %cst_32 : f32 to vector<16x44xf32>
    %57 = arith.mulf %56, %55 : vector<16x44xf32>
    %58 = arith.subf %54, %57 : vector<16x44xf32>
    %c7_33 = arith.constant 7 : index
    %c0_34 = arith.constant 0 : index
    %59 = vector.load %arg4[%c7_33, %c0_34] : memref<28x44xf32, #tpu.memory_space<vmem>>, vector<16x44xf32>
    %c5_35 = arith.constant 5 : index
    %c0_36 = arith.constant 0 : index
    %60 = vector.load %arg4[%c5_35, %c0_36] : memref<28x44xf32, #tpu.memory_space<vmem>>, vector<16x44xf32>
    %61 = arith.addf %59, %60 : vector<16x44xf32>
    %cst_37 = arith.constant 0.164012015 : f32
    %62 = vector.broadcast %cst_37 : f32 to vector<16x44xf32>
    %63 = arith.mulf %62, %61 : vector<16x44xf32>
    %64 = arith.addf %58, %63 : vector<16x44xf32>
    %c7_38 = arith.constant 7 : index
    %c0_39 = arith.constant 0 : index
    %65 = vector.load %arg3[%c7_38, %c0_39] : memref<28x44xf32, #tpu.memory_space<vmem>>, vector<16x44xf32>
    %c5_40 = arith.constant 5 : index
    %c0_41 = arith.constant 0 : index
    %66 = vector.load %arg3[%c5_40, %c0_41] : memref<28x44xf32, #tpu.memory_space<vmem>>, vector<16x44xf32>
    %67 = arith.addf %65, %66 : vector<16x44xf32>
    %cst_42 = arith.constant 0.242036223 : f32
    %68 = vector.broadcast %cst_42 : f32 to vector<16x44xf32>
    %69 = arith.mulf %68, %67 : vector<16x44xf32>
    %70 = arith.subf %64, %69 : vector<16x44xf32>
    %c8_43 = arith.constant 8 : index
    %c0_44 = arith.constant 0 : index
    %71 = vector.load %arg4[%c8_43, %c0_44] : memref<28x44xf32, #tpu.memory_space<vmem>>, vector<16x44xf32>
    %c4_45 = arith.constant 4 : index
    %c0_46 = arith.constant 0 : index
    %72 = vector.load %arg4[%c4_45, %c0_46] : memref<28x44xf32, #tpu.memory_space<vmem>>, vector<16x44xf32>
    %73 = arith.addf %71, %72 : vector<16x44xf32>
    %cst_47 = arith.constant 0.12030407 : f32
    %74 = vector.broadcast %cst_47 : f32 to vector<16x44xf32>
    %75 = arith.mulf %74, %73 : vector<16x44xf32>
    %76 = arith.addf %70, %75 : vector<16x44xf32>
    %c8_48 = arith.constant 8 : index
    %c0_49 = arith.constant 0 : index
    %77 = vector.load %arg3[%c8_48, %c0_49] : memref<28x44xf32, #tpu.memory_space<vmem>>, vector<16x44xf32>
    %c4_50 = arith.constant 4 : index
    %c0_51 = arith.constant 0 : index
    %78 = vector.load %arg3[%c4_50, %c0_51] : memref<28x44xf32, #tpu.memory_space<vmem>>, vector<16x44xf32>
    %79 = arith.addf %77, %78 : vector<16x44xf32>
    %cst_52 = arith.constant 0.0540055782 : f32
    %80 = vector.broadcast %cst_52 : f32 to vector<16x44xf32>
    %81 = arith.mulf %80, %79 : vector<16x44xf32>
    %82 = arith.subf %76, %81 : vector<16x44xf32>
    %c9_53 = arith.constant 9 : index
    %c0_54 = arith.constant 0 : index
    %83 = vector.load %arg4[%c9_53, %c0_54] : memref<28x44xf32, #tpu.memory_space<vmem>>, vector<16x44xf32>
    %c3_55 = arith.constant 3 : index
    %c0_56 = arith.constant 0 : index
    %84 = vector.load %arg4[%c3_55, %c0_56] : memref<28x44xf32, #tpu.memory_space<vmem>>, vector<16x44xf32>
    %85 = arith.addf %83, %84 : vector<16x44xf32>
    %cst_57 = arith.constant 0.0717719346 : f32
    %86 = vector.broadcast %cst_57 : f32 to vector<16x44xf32>
    %87 = arith.mulf %86, %85 : vector<16x44xf32>
    %88 = arith.addf %82, %87 : vector<16x44xf32>
    %c9_58 = arith.constant 9 : index
    %c0_59 = arith.constant 0 : index
    %89 = vector.load %arg3[%c9_58, %c0_59] : memref<28x44xf32, #tpu.memory_space<vmem>>, vector<16x44xf32>
    %c3_60 = arith.constant 3 : index
    %c0_61 = arith.constant 0 : index
    %90 = vector.load %arg3[%c3_60, %c0_61] : memref<28x44xf32, #tpu.memory_space<vmem>>, vector<16x44xf32>
    %91 = arith.addf %89, %90 : vector<16x44xf32>
    %cst_62 = arith.constant 0.00443304796 : f32
    %92 = vector.broadcast %cst_62 : f32 to vector<16x44xf32>
    %93 = arith.mulf %92, %91 : vector<16x44xf32>
    %94 = arith.subf %88, %93 : vector<16x44xf32>
    %c10_63 = arith.constant 10 : index
    %c0_64 = arith.constant 0 : index
    %95 = vector.load %arg4[%c10_63, %c0_64] : memref<28x44xf32, #tpu.memory_space<vmem>>, vector<16x44xf32>
    %c2_65 = arith.constant 2 : index
    %c0_66 = arith.constant 0 : index
    %96 = vector.load %arg4[%c2_65, %c0_66] : memref<28x44xf32, #tpu.memory_space<vmem>>, vector<16x44xf32>
    %97 = arith.addf %95, %96 : vector<16x44xf32>
    %cst_67 = arith.constant 0.0348256119 : f32
    %98 = vector.broadcast %cst_67 : f32 to vector<16x44xf32>
    %99 = arith.mulf %98, %97 : vector<16x44xf32>
    %100 = arith.addf %94, %99 : vector<16x44xf32>
    %c11_68 = arith.constant 11 : index
    %c0_69 = arith.constant 0 : index
    %101 = vector.load %arg4[%c11_68, %c0_69] : memref<28x44xf32, #tpu.memory_space<vmem>>, vector<16x44xf32>
    %c1_70 = arith.constant 1 : index
    %c0_71 = arith.constant 0 : index
    %102 = vector.load %arg4[%c1_70, %c0_71] : memref<28x44xf32, #tpu.memory_space<vmem>>, vector<16x44xf32>
    %103 = arith.addf %101, %102 : vector<16x44xf32>
    %cst_72 = arith.constant 0.0137439817 : f32
    %104 = vector.broadcast %cst_72 : f32 to vector<16x44xf32>
    %105 = arith.mulf %104, %103 : vector<16x44xf32>
    %106 = arith.addf %100, %105 : vector<16x44xf32>
    %c12_73 = arith.constant 12 : index
    %c0_74 = arith.constant 0 : index
    %107 = vector.load %arg4[%c12_73, %c0_74] : memref<28x44xf32, #tpu.memory_space<vmem>>, vector<16x44xf32>
    %c0_75 = arith.constant 0 : index
    %c0_76 = arith.constant 0 : index
    %108 = vector.load %arg4[%c0_75, %c0_76] : memref<28x44xf32, #tpu.memory_space<vmem>>, vector<16x44xf32>
    %109 = arith.addf %107, %108 : vector<16x44xf32>
    %cst_77 = arith.constant 0.0044115996 : f32
    %110 = vector.broadcast %cst_77 : f32 to vector<16x44xf32>
    %111 = arith.mulf %110, %109 : vector<16x44xf32>
    %112 = arith.addf %106, %111 : vector<16x44xf32>
    %c0_78 = arith.constant 0 : index
    %c0_79 = arith.constant 0 : index
    %113 = vector.load %arg2[%c0_78, %c0_79] : memref<16x44xf32, #tpu.memory_space<vmem>>, vector<16x44xf32>
    tpu.vector_store %arg2[%c0_78, %c0_79], %112 {strides = array<i32>} : memref<16x44xf32, #tpu.memory_space<vmem>>, vector<16x44xf32>,
    return
  }
  func.func @transform_0(%arg0: i32) -> (i32, i32) {
    %c0_i32 = arith.constant 0 : i32
    %c0_i32_0 = arith.constant 0 : i32
    %c0_i32_1 = arith.constant 0 : i32
    return %c0_i32, %c0_i32_0 : i32, i32
  }
  func.func @transform_1(%arg0: i32) -> (i32, i32) {
    %c0_i32 = arith.constant 0 : i32
    %c0_i32_0 = arith.constant 0 : i32
    %c0_i32_1 = arith.constant 0 : i32
    return %c0_i32, %c0_i32_0 : i32, i32
  }
}

</mosaic_0001>

<llo_original>
// kernel: _lambda_.1
$region0: #{_lambda_.1}
  #allocation0 [shape = 'u32[]', space=smem, size = 0x4, offset = 0x4, fixed_abs, tag = 'smem constant byte address 0x4 - core index']
  #allocation1 [shape = 'u32[144,128]{1,0:T(1,128)}', space=vmem, size = 0x12000, scoped, tag = 'internal scratch']
  #allocation2 [shape = 'f32[28,44]{1,0:T(8,128)}', space=vmem, size = 0x4000, scoped, tag = 'scratch operand']
  #allocation3 [shape = 'f32[28,44]{1,0:T(8,128)}', space=vmem, size = 0x4000, scoped, tag = 'scratch operand']
  %s0 = inlined_call_operand.vmem [shape: f32[28,56], index: 0, kind: input, shape index: {}]
  %s1 = inlined_call_operand.vmem [shape: f32[16,44], index: 1, kind: output, shape index: {}]
  %s2 = sld [smem:[#allocation0]]
  $region14: #{_lambda_.1} parent=0
    _
  %s4 = ssub.s32 1, %s2
  %s5 = scalar_select 0, %s4, %s2
  // Predicated region
  $region2: #{_lambda_.1} parent=0 // pred_check
    _
  $region3: #{_lambda_.1} parent=0 // pred_check_branch
    %7 = sbr.rel (0) target = $region5
  $region4: #{_lambda_.1} parent=0 // pred_region
    _
  $region5: #{_lambda_.1} parent=0 // pred_fallthru
    _
  %v8 = vld [vmem:[%s0] sm:$0xff]
  %v9 = vld [vmem:[%s0 + $0x8] sm:$0xff]
  %v10 = vld [vmem:[%s0 + $0x10] sm:$0xff]
  %v11 = vld [vmem:[%s0 + $0x18] sm:$0xf]
  %v12 = vmul.f32 %v8, 0.39905027
  %v13 = vmul.f32 %v9, 0.39905027
  %v14 = vmul.f32 %v10, 0.39905027
  %v15 = vmul.f32 %v11, 0.39905027
  %v16 = vmul.f32 %v8, 0.18186152
  %v17 = vmul.f32 %v9, 0.18186152
  %v18 = vmul.f32 %v10, 0.18186152
  %v19 = vmul.f32 %v11, 0.18186152
  %24 = vrot.lane.b32.xlu0 %v8, 2
  %v25 = vpop.permute.xlu0 %24
  %26 = vrot.lane.b32.xlu0 %v9, 2
  %v27 = vpop.permute.xlu0 %26
  %28 = vrot.lane.b32.xlu0 %v10, 2
  %v29 = vpop.permute.xlu0 %28
  %30 = vrot.lane.b32.xlu0 %v11, 2
  %v31 = vpop.permute.xlu0 %30
  %v36 = vadd.f32 %v8, %v25
  %v37 = vadd.f32 %v9, %v27
  %v38 = vadd.f32 %v10, %v29
  %v39 = vadd.f32 %v11, %v31
  %v40 = vmul.f32 %v36, 0.24203622
  %v41 = vmul.f32 %v37, 0.24203622
  %v42 = vmul.f32 %v38, 0.24203622
  %v43 = vmul.f32 %v39, 0.24203622
  %48 = vrot.lane.b32.xlu0 %v40, 127
  %v49 = vpop.permute.xlu0 %48
  %50 = vrot.lane.b32.xlu0 %v41, 127
  %v51 = vpop.permute.xlu0 %50
  %52 = vrot.lane.b32.xlu0 %v42, 127
  %v53 = vpop.permute.xlu0 %52
  %54 = vrot.lane.b32.xlu0 %v43, 127
  %v55 = vpop.permute.xlu0 %54
  %v60 = vadd.f32 %v12, %v49
  %v61 = vadd.f32 %v13, %v51
  %v62 = vadd.f32 %v14, %v53
  %v63 = vadd.f32 %v15, %v55
  %v64 = vmul.f32 %v36, 0.16401201
  %v65 = vmul.f32 %v37, 0.16401201
  %v66 = vmul.f32 %v38, 0.16401201
  %v67 = vmul.f32 %v39, 0.16401201
  %72 = vrot.lane.b32.xlu0 %v64, 127
  %v73 = vpop.permute.xlu0 %72
  %74 = vrot.lane.b32.xlu0 %v65, 127
  %v75 = vpop.permute.xlu0 %74
  %76 = vrot.lane.b32.xlu0 %v66, 127
  %v77 = vpop.permute.xlu0 %76
  %78 = vrot.lane.b32.xlu0 %v67, 127
  %v79 = vpop.permute.xlu0 %78
  %v84 = vadd.f32 %v16, %v73
  %v85 = vadd.f32 %v17, %v75
  %v86 = vadd.f32 %v18, %v77
  %v87 = vadd.f32 %v19, %v79
  %88 = vrot.lane.b32.xlu0 %v8, 4
  %v89 = vpop.permute.xlu0 %88
  %90 = vrot.lane.b32.xlu0 %v9, 4
  %v91 = vpop.permute.xlu0 %90
  %92 = vrot.lane.b32.xlu0 %v10, 4
  %v93 = vpop.permute.xlu0 %92
  %94 = vrot.lane.b32.xlu0 %v11, 4
  %v95 = vpop.permute.xlu0 %94
  %v100 = vadd.f32 %v8, %v89
  %v101 = vadd.f32 %v9, %v91
  %v102 = vadd.f32 %v10, %v93
  %v103 = vadd.f32 %v11, %v95
  %v104 = vmul.f32 %v100, 0.05400558
  %v105 = vmul.f32 %v101, 0.05400558
  %v106 = vmul.f32 %v102, 0.05400558
  %v107 = vmul.f32 %v103, 0.05400558
  %112 = vrot.lane.b32.xlu0 %v104, 126
  %v113 = vpop.permute.xlu0 %112
  %114 = vrot.lane.b32.xlu0 %v105, 126
  %v115 = vpop.permute.xlu0 %114
  %116 = vrot.lane.b32.xlu0 %v106, 126
  %v117 = vpop.permute.xlu0 %116
  %118 = vrot.lane.b32.xlu0 %v107, 126
  %v119 = vpop.permute.xlu0 %118
  %v124 = vadd.f32 %v60, %v113
  %v125 = vadd.f32 %v61, %v115
  %v126 = vadd.f32 %v62, %v117
  %v127 = vadd.f32 %v63, %v119
  %v128 = vmul.f32 %v100, 0.12030407
  %v129 = vmul.f32 %v101, 0.12030407
  %v130 = vmul.f32 %v102, 0.12030407
  %v131 = vmul.f32 %v103, 0.12030407
  %136 = vrot.lane.b32.xlu0 %v128, 126
  %v137 = vpop.permute.xlu0 %136
  %138 = vrot.lane.b32.xlu0 %v129, 126
  %v139 = vpop.permute.xlu0 %138
  %140 = vrot.lane.b32.xlu0 %v130, 126
  %v141 = vpop.permute.xlu0 %140
  %142 = vrot.lane.b32.xlu0 %v131, 126
  %v143 = vpop.permute.xlu0 %142
  %v148 = vadd.f32 %v84, %v137
  %v149 = vadd.f32 %v85, %v139
  %v150 = vadd.f32 %v86, %v141
  %v151 = vadd.f32 %v87, %v143
  %152 = vrot.lane.b32.xlu0 %v8, 6
  %v153 = vpop.permute.xlu0 %152
  %154 = vrot.lane.b32.xlu0 %v9, 6
  %v155 = vpop.permute.xlu0 %154
  %156 = vrot.lane.b32.xlu0 %v10, 6
  %v157 = vpop.permute.xlu0 %156
  %158 = vrot.lane.b32.xlu0 %v11, 6
  %v159 = vpop.permute.xlu0 %158
  %v164 = vadd.f32 %v8, %v153
  %v165 = vadd.f32 %v9, %v155
  %v166 = vadd.f32 %v10, %v157
  %v167 = vadd.f32 %v11, %v159
  %v168 = vmul.f32 %v164, 0.004433048
  %v169 = vmul.f32 %v165, 0.004433048
  %v170 = vmul.f32 %v166, 0.004433048
  %v171 = vmul.f32 %v167, 0.004433048
  %176 = vrot.lane.b32.xlu0 %v168, 125
  %v177 = vpop.permute.xlu0 %176
  %178 = vrot.lane.b32.xlu0 %v169, 125
  %v179 = vpop.permute.xlu0 %178
  %180 = vrot.lane.b32.xlu0 %v170, 125
  %v181 = vpop.permute.xlu0 %180
  %182 = vrot.lane.b32.xlu0 %v171, 125
  %v183 = vpop.permute.xlu0 %182
  %v188 = vadd.f32 %v124, %v177
  %v189 = vadd.f32 %v125, %v179
  %v190 = vadd.f32 %v126, %v181
  %v191 = vadd.f32 %v127, %v183
  %v192 = vmul.f32 %v164, 0.071771935
  %v193 = vmul.f32 %v165, 0.071771935
  %v194 = vmul.f32 %v166, 0.071771935
  %v195 = vmul.f32 %v167, 0.071771935
  %200 = vrot.lane.b32.xlu0 %v192, 125
  %v201 = vpop.permute.xlu0 %200
  %202 = vrot.lane.b32.xlu0 %v193, 125
  %v203 = vpop.permute.xlu0 %202
  %204 = vrot.lane.b32.xlu0 %v194, 125
  %v205 = vpop.permute.xlu0 %204
  %206 = vrot.lane.b32.xlu0 %v195, 125
  %v207 = vpop.permute.xlu0 %206
  %v212 = vadd.f32 %v148, %v201
  %v213 = vadd.f32 %v149, %v203
  %v214 = vadd.f32 %v150, %v205
  %v215 = vadd.f32 %v151, %v207
  %216 = vrot.lane.b32.xlu0 %v8, 8
  %v217 = vpop.permute.xlu0 %216
  %218 = vrot.lane.b32.xlu0 %v9, 8
  %v219 = vpop.permute.xlu0 %218
  %220 = vrot.lane.b32.xlu0 %v10, 8
  %v221 = vpop.permute.xlu0 %220
  %222 = vrot.lane.b32.xlu0 %v11, 8
  %v223 = vpop.permute.xlu0 %222
  %v228 = vadd.f32 %v8, %v217
  %v229 = vadd.f32 %v9, %v219
  %v230 = vadd.f32 %v10, %v221
  %v231 = vadd.f32 %v11, %v223
  %v232 = vmul.f32 %v228, 0.03482561
  %v233 = vmul.f32 %v229, 0.03482561
  %v234 = vmul.f32 %v230, 0.03482561
  %v235 = vmul.f32 %v231, 0.03482561
  %240 = vrot.lane.b32.xlu0 %v232, 124
  %v241 = vpop.permute.xlu0 %240
  %242 = vrot.lane.b32.xlu0 %v233, 124
  %v243 = vpop.permute.xlu0 %242
  %244 = vrot.lane.b32.xlu0 %v234, 124
  %v245 = vpop.permute.xlu0 %244
  %246 = vrot.lane.b32.xlu0 %v235, 124
  %v247 = vpop.permute.xlu0 %246
  %v252 = vadd.f32 %v212, %v241
  %v253 = vadd.f32 %v213, %v243
  %v254 = vadd.f32 %v214, %v245
  %v255 = vadd.f32 %v215, %v247
  %256 = vrot.lane.b32.xlu0 %v8, 10
  %v257 = vpop.permute.xlu0 %256
  %258 = vrot.lane.b32.xlu0 %v9, 10
  %v259 = vpop.permute.xlu0 %258
  %260 = vrot.lane.b32.xlu0 %v10, 10
  %v261 = vpop.permute.xlu0 %260
  %262 = vrot.lane.b32.xlu0 %v11, 10
  %v263 = vpop.permute.xlu0 %262
  %v268 = vadd.f32 %v8, %v257
  %v269 = vadd.f32 %v9, %v259
  %v270 = vadd.f32 %v10, %v261
  %v271 = vadd.f32 %v11, %v263
  %v272 = vmul.f32 %v268, 0.013743982
  %v273 = vmul.f32 %v269, 0.013743982
  %v274 = vmul.f32 %v270, 0.013743982
  %v275 = vmul.f32 %v271, 0.013743982
  %280 = vrot.lane.b32.xlu0 %v272, 123
  %v281 = vpop.permute.xlu0 %280
  %282 = vrot.lane.b32.xlu0 %v273, 123
  %v283 = vpop.permute.xlu0 %282
  %284 = vrot.lane.b32.xlu0 %v274, 123
  %v285 = vpop.permute.xlu0 %284
  %286 = vrot.lane.b32.xlu0 %v275, 123
  %v287 = vpop.permute.xlu0 %286
  %v292 = vadd.f32 %v252, %v281
  %v293 = vadd.f32 %v253, %v283
  %v294 = vadd.f32 %v254, %v285
  %v295 = vadd.f32 %v255, %v287
  %296 = vrot.lane.b32.xlu0 %v8, 12
  %v297 = vpop.permute.xlu0 %296
  %298 = vrot.lane.b32.xlu0 %v9, 12
  %v299 = vpop.permute.xlu0 %298
  %300 = vrot.lane.b32.xlu0 %v10, 12
  %v301 = vpop.permute.xlu0 %300
  %302 = vrot.lane.b32.xlu0 %v11, 12
  %v303 = vpop.permute.xlu0 %302
  %v308 = vadd.f32 %v8, %v297
  %v309 = vadd.f32 %v9, %v299
  %v310 = vadd.f32 %v10, %v301
  %v311 = vadd.f32 %v11, %v303
  %v312 = vmul.f32 %v308, 0.0044115996
  %v313 = vmul.f32 %v309, 0.0044115996
  %v314 = vmul.f32 %v310, 0.0044115996
  %v315 = vmul.f32 %v311, 0.0044115996
  %320 = vrot.lane.b32.xlu0 %v312, 122
  %v321 = vpop.permute.xlu0 %320
  %322 = vrot.lane.b32.xlu0 %v313, 122
  %v323 = vpop.permute.xlu0 %322
  %324 = vrot.lane.b32.xlu0 %v314, 122
  %v325 = vpop.permute.xlu0 %324
  %326 = vrot.lane.b32.xlu0 %v315, 122
  %v327 = vpop.permute.xlu0 %326
  %v332 = vadd.f32 %v292, %v321
  %v333 = vadd.f32 %v293, %v323
  %v334 = vadd.f32 %v294, %v325
  %v335 = vadd.f32 %v295, %v327
  %340 = vrot.lane.b32.xlu0 %v188, 122
  %v341 = vpop.permute.xlu0 %340
  %342 = vrot.lane.b32.xlu0 %v189, 122
  %v343 = vpop.permute.xlu0 %342
  %344 = vrot.lane.b32.xlu0 %v190, 122
  %v345 = vpop.permute.xlu0 %344
  %346 = vrot.lane.b32.xlu0 %v191, 122
  %v347 = vpop.permute.xlu0 %346
  %vm352 = vcmask 359424
  %353 = vst.msk [vmem:[#allocation2] sm:$0xff] %vm352, %v341
  %354 = vst.msk [vmem:[#allocation2 + $0x8] sm:$0xff] %vm352, %v343
  %355 = vst.msk [vmem:[#allocation2 + $0x10] sm:$0xff] %vm352, %v345
  %vm356 = vcmask 355328
  %357 = vst.msk [vmem:[#allocation2 + $0x18] sm:$0xf] %vm356, %v347
  %362 = vrot.lane.b32.xlu0 %v332, 122
  %v363 = vpop.permute.xlu0 %362
  %364 = vrot.lane.b32.xlu0 %v333, 122
  %v365 = vpop.permute.xlu0 %364
  %366 = vrot.lane.b32.xlu0 %v334, 122
  %v367 = vpop.permute.xlu0 %366
  %368 = vrot.lane.b32.xlu0 %v335, 122
  %v369 = vpop.permute.xlu0 %368
  %374 = vst.msk [vmem:[#allocation3] sm:$0xff] %vm352, %v363
  %375 = vst.msk [vmem:[#allocation3 + $0x8] sm:$0xff] %vm352, %v365
  %376 = vst.msk [vmem:[#allocation3 + $0x10] sm:$0xff] %vm352, %v367
  %377 = vst.msk [vmem:[#allocation3 + $0x18] sm:$0xf] %vm356, %v369
  %v378 = vld [vmem:[#allocation3 + $0x6] sm:$0xff]
  %v379 = vld [vmem:[#allocation3 + $0xe] sm:$0xff]
  %v380 = vmul.f32 %v378, 0.18186152
  %v381 = vmul.f32 %v379, 0.18186152
  %v382 = vld [vmem:[#allocation2 + $0x6] sm:$0xff]
  %v383 = vld [vmem:[#allocation2 + $0xe] sm:$0xff]
  %v384 = vmul.f32 %v382, 0.39905027
  %v385 = vmul.f32 %v383, 0.39905027
  %v386 = vsub.f32 %v380, %v384
  %v387 = vsub.f32 %v381, %v385
  %v388 = vld [vmem:[#allocation3 + $0x7] sm:$0xff]
  %v389 = vld [vmem:[#allocation3 + $0xf] sm:$0xff]
  %v390 = vld [vmem:[#allocation3 + $0x5] sm:$0xff]
  %v391 = vld [vmem:[#allocation3 + $0xd] sm:$0xff]
  %v392 = vadd.f32 %v388, %v390
  %v393 = vadd.f32 %v389, %v391
  %v394 = vmul.f32 %v392, 0.16401201
  %v395 = vmul.f32 %v393, 0.16401201
  %v396 = vadd.f32 %v386, %v394
  %v397 = vadd.f32 %v387, %v395
  %v398 = vld [vmem:[#allocation2 + $0x7] sm:$0xff]
  %v399 = vld [vmem:[#allocation2 + $0xf] sm:$0xff]
  %v400 = vld [vmem:[#allocation2 + $0x5] sm:$0xff]
  %v401 = vld [vmem:[#allocation2 + $0xd] sm:$0xff]
  %v402 = vadd.f32 %v398, %v400
  %v403 = vadd.f32 %v399, %v401
  %v404 = vmul.f32 %v402, 0.24203622
  %v405 = vmul.f32 %v403, 0.24203622
  %v406 = vsub.f32 %v396, %v404
  %v407 = vsub.f32 %v397, %v405
  %v408 = vld [vmem:[#allocation3 + $0x8] sm:$0xff]
  %v409 = vld [vmem:[#allocation3 + $0x10] sm:$0xff]
  %v410 = vld [vmem:[#allocation3 + $0x4] sm:$0xff]
  %v411 = vld [vmem:[#allocation3 + $0xc] sm:$0xff]
  %v412 = vadd.f32 %v408, %v410
  %v413 = vadd.f32 %v409, %v411
  %v414 = vmul.f32 %v412, 0.12030407
  %v415 = vmul.f32 %v413, 0.12030407
  %v416 = vadd.f32 %v406, %v414
  %v417 = vadd.f32 %v407, %v415
  %v418 = vld [vmem:[#allocation2 + $0x8] sm:$0xff]
  %v419 = vld [vmem:[#allocation2 + $0x10] sm:$0xff]
  %v420 = vld [vmem:[#allocation2 + $0x4] sm:$0xff]
  %v421 = vld [vmem:[#allocation2 + $0xc] sm:$0xff]
  %v422 = vadd.f32 %v418, %v420
  %v423 = vadd.f32 %v419, %v421
  %v424 = vmul.f32 %v422, 0.05400558
  %v425 = vmul.f32 %v423, 0.05400558
  %v426 = vsub.f32 %v416, %v424
  %v427 = vsub.f32 %v417, %v425
  %v428 = vld [vmem:[#allocation3 + $0x9] sm:$0xff]
  %v429 = vld [vmem:[#allocation3 + $0x11] sm:$0xff]
  %v430 = vld [vmem:[#allocation3 + $0x3] sm:$0xff]
  %v431 = vld [vmem:[#allocation3 + $0xb] sm:$0xff]
  %v432 = vadd.f32 %v428, %v430
  %v433 = vadd.f32 %v429, %v431
  %v434 = vmul.f32 %v432, 0.071771935
  %v435 = vmul.f32 %v433, 0.071771935
  %v436 = vadd.f32 %v426, %v434
  %v437 = vadd.f32 %v427, %v435
  %v438 = vld [vmem:[#allocation2 + $0x9] sm:$0xff]
  %v439 = vld [vmem:[#allocation2 + $0x11] sm:$0xff]
  %v440 = vld [vmem:[#allocation2 + $0x3] sm:$0xff]
  %v441 = vld [vmem:[#allocation2 + $0xb] sm:$0xff]
  %v442 = vadd.f32 %v438, %v440
  %v443 = vadd.f32 %v439, %v441
  %v444 = vmul.f32 %v442, 0.004433048
  %v445 = vmul.f32 %v443, 0.004433048
  %v446 = vsub.f32 %v436, %v444
  %v447 = vsub.f32 %v437, %v445
  %v448 = vld [vmem:[#allocation3 + $0xa] sm:$0xff]
  %v449 = vld [vmem:[#allocation3 + $0x12] sm:$0xff]
  %v450 = vld [vmem:[#allocation3 + $0x2] sm:$0xff]
  %v451 = vadd.f32 %v448, %v450
  %v452 = vadd.f32 %v449, %v448
  %v453 = vmul.f32 %v451, 0.03482561
  %v454 = vmul.f32 %v452, 0.03482561
  %v455 = vadd.f32 %v446, %v453
  %v456 = vadd.f32 %v447, %v454
  %v457 = vld [vmem:[#allocation3 + $0x13] sm:$0xff]
  %v458 = vld [vmem:[#allocation3 + $0x1] sm:$0xff]
  %v459 = vadd.f32 %v431, %v458
  %v460 = vadd.f32 %v457, %v428
  %v461 = vmul.f32 %v459, 0.013743982
  %v462 = vmul.f32 %v460, 0.013743982
  %v463 = vadd.f32 %v455, %v461
  %v464 = vadd.f32 %v456, %v462
  %v465 = vld [vmem:[#allocation3 + $0x14] sm:$0xff]
  %v466 = vld [vmem:[#allocation3] sm:$0xff]
  %v467 = vadd.f32 %v411, %v466
  %v468 = vadd.f32 %v465, %v408
  %v469 = vmul.f32 %v467, 0.0044115996
  %v470 = vmul.f32 %v468, 0.0044115996
  %v471 = vadd.f32 %v463, %v469
  %v472 = vadd.f32 %v464, %v470
  %473 = vst.msk [vmem:[%s1] sm:$0xff] %vm352, %v471
  %474 = vst.msk [vmem:[%s1 + $0x8] sm:$0xff] %vm352, %v472
  // Predicated region
  $region6: #{_lambda_.1} parent=0 // pred_check
    _
  $region7: #{_lambda_.1} parent=0 // pred_check_branch
    %476 = sbr.rel (0) target = $region9
  $region8: #{_lambda_.1} parent=0 // pred_region
    _
  $region9: #{_lambda_.1} parent=0 // pred_fallthru
    _
  // Predicated region
  $region10: #{_lambda_.1} parent=0 // pred_check
    _
  $region11: #{_lambda_.1} parent=0 // pred_check_branch
    %478 = sbr.rel (0) target = $region13
  $region12: #{_lambda_.1} parent=0 // pred_region
    _
  $region13: #{_lambda_.1} parent=0 // pred_fallthru
    _

</llo_original>
